<compile_context>
chip_gen: v6e
topology: v6e:2x2x1
jax: 0.10.0
libtpu: 0.0.40
codegen_flags: <defaults>
</compile_context>

<pallas_src>
from functools import partial

import jax
import jax.numpy as jnp
import numpy as np
from jax.experimental import pallas as pl
from jax.experimental.pallas import tpu as pltpu


_STRIDED_MAX_K = 16      # above this window size the reduction moves to the MXU
_MXU_MIN_WINDOWS = 8     # >= this many windows per block also moves to the MXU


# ----------------------------------------------------------------------------
# Kernels (all emit a lane-dense (TB, OW, TD) tile: D stays on the 128-lane axis)
# ----------------------------------------------------------------------------

def _pool_reduce_kernel(x_ref, o_ref, *, kernel_size):
    """out_len == 1 path: mean over the first `kernel_size` rows of the L axis.

    x_ref: (TB, L, TD) -> o_ref: (TB, 1, TD)."""
    inv_k = 1.0 / kernel_size
    for b in range(x_ref.shape[0]):
        xb = x_ref.at[b]                                   # (L, TD) ref view
        win = xb[:kernel_size, :].astype(jnp.float32)      # drop remainder rows
        o_ref[b] = (jnp.sum(win, axis=0, keepdims=True) * inv_k).astype(o_ref.dtype)


def _pool_strided_kernel(x_ref, o_ref, *, kernel_size, out_win):
    """Small windows: accumulate window element j via strided sublane slices
    (rows j, j+k, j+2k, ...).  Pure vld + VPU adds; lane layout untouched.

    x_ref: (TB, TL, TD) -> o_ref: (TB, out_win, TD)."""
    inv_k = 1.0 / kernel_size
    for b in range(x_ref.shape[0]):
        xb = x_ref.at[b]

        def _elem(j):
            if out_win == 1:
                sl = pl.ds(j, 1)
            else:
                sl = pl.ds(j, out_win, stride=kernel_size)
            return xb[sl, :].astype(jnp.float32)

        acc = _elem(0)
        for j in range(1, kernel_size):
            acc = acc + _elem(j)
        o_ref[b] = (acc * inv_k).astype(o_ref.dtype)


def _pool_mxu_kernel(pm_ref, x_ref, o_ref):
    """Large / many windows: fold the reduction into the MXU with a constant
    (out_win, TL) averaging matrix hoisted to the wrapper (constant index_map,
    so it stays VMEM-resident across the whole grid; zero-weight columns
    reproduce AvgPool1d's remainder truncation).

    pm_ref: (out_win, TL); x_ref: (TB, TL, TD) -> o_ref: (TB, out_win, TD)."""
    pm = pm_ref[...]
    for b in range(x_ref.shape[0]):
        # Native-dtype operands (bf16 stays bf16); MXU accumulates in f32.
        o_ref[b] = jnp.dot(pm, x_ref[b],
                           preferred_element_type=jnp.float32).astype(o_ref.dtype)


# ----------------------------------------------------------------------------
# Tiling policy
# ----------------------------------------------------------------------------

def _vmem_capacity_bytes():
    try:
        info = pltpu.get_tpu_info()
        return int(getattr(info, "vmem_capacity_bytes", 64 << 20))
    except Exception:
        return 64 << 20  # conservative (v7x per-TC)


def _choose_tiles(B, L, D, kernel_size, out_len, itemsize, budget):
    """Return (TB, TL, TD, OW) block sizes."""
    # --- D (lane) tile: >=512 B contiguous DMA rows, prefer full width -------
    if D % 128 != 0:
        TD = D                           # odd widths: only the full dim is a legal block
    else:
        min_td = max(128, ((512 // itemsize) + 127) // 128 * 128)   # f32:128 bf16:256 i8:512
        divs = [t for t in range(128, D + 1, 128) if D % t == 0]
        cands = [t for t in divs if t >= min(min_td, D)] or [divs[-1]]
        fitting = [t for t in cands if L * t * itemsize <= budget]
        TD = max(fitting) if fitting else min(cands)

    # --- L tile: whole windows per block, multiple-of-8 output rows ----------
    OW = out_len
    if out_len > 1 and L * TD * itemsize > budget:
        for cand in range(8, out_len, 8):
            if out_len % cand == 0 and cand * kernel_size * TD * itemsize <= budget:
                OW = cand                                 # keeps the largest fitting value
    TL = L if OW == out_len else OW * kernel_size
    num_w = out_len // OW

    # --- batch merge: only when one block already spans the full (L, D) ------
    TB = 1
    if num_w == 1 and TD == D and B > 1:
        per_ex = max(1, L * D * itemsize)
        max_tb = max(1, budget // per_ex)
        max_tb = min(max_tb, B // 2)      # keep >=2 grid steps (dual TC / pipelining)
        TB = max(t for t in range(1, B + 1) if B % t == 0 and t <= max_tb)
    return TB, TL, TD, OW


# ----------------------------------------------------------------------------
# Public wrapper
# ----------------------------------------------------------------------------

def avg_pool(x, kernel_size):
    """Pallas equivalent of AvgPool.forward(x, mask=None)."""
    B, L, D = x.shape
    out_len = L // kernel_size
    assert out_len >= 1, "kernel_size larger than sequence length"
    itemsize = jnp.dtype(x.dtype).itemsize

    phys_vmem = _vmem_capacity_bytes()
    # Per-tile input budget: big tiles amortize the ~0.35 us/step pipeline
    # overhead; slightly smaller target on v7x (64 MiB VMEM per TC).
    budget = (6 << 20) if phys_vmem <= (64 << 20) else (8 << 20)

    TB, TL, TD, OW = _choose_tiles(B, L, D, kernel_size, out_len, itemsize, budget)
    grid = (B // TB, out_len // OW, D // TD)

    # Path selection: tiny k on f32 -> strided VPU accumulation; otherwise MXU
    # matmul against the hoisted averaging matrix (also used for bf16 inputs,
    # where VPU adds need widening anyway, and for many windows per block,
    # where the strided path makes k passes over a large accumulator).
    if out_len == 1:
        mode = "reduce"
    elif kernel_size <= _STRIDED_MAX_K and OW < _MXU_MIN_WINDOWS and itemsize >= 4:
        mode = "strided"
    else:
        mode = "mxu"

    x_spec = pl.BlockSpec((TB, TL, TD), lambda b, w, d: (b, w, d))
    o_spec = pl.BlockSpec((TB, OW, TD), lambda b, w, d: (b, w, d))

    operands = [x]
    if mode == "reduce":
        kernel = partial(_pool_reduce_kernel, kernel_size=kernel_size)
        in_specs = [x_spec]
        pm_tile = 0
    elif mode == "strided":
        kernel = partial(_pool_strided_kernel, kernel_size=kernel_size, out_win=OW)
        in_specs = [x_spec]
        pm_tile = 0
    else:
        pm = np.zeros((OW, TL), dtype=np.float32)
        for i in range(OW):
            pm[i, i * kernel_size:(i + 1) * kernel_size] = 1.0 / kernel_size
        pool_mat = jnp.asarray(pm, dtype=x.dtype)   # native dtype -> MXU-native matmul
        kernel = _pool_mxu_kernel
        in_specs = [pl.BlockSpec((OW, TL), lambda b, w, d: (0, 0)), x_spec]
        operands = [pool_mat, x]
        pm_tile = OW * TL * itemsize

    in_tile = TB * TL * TD * itemsize
    out_tile = TB * OW * TD * itemsize
    cap = max(16 << 20, phys_vmem - (12 << 20))     # leave compiler headroom below physical
    need = 3 * (in_tile + out_tile) + 2 * pm_tile + (2 << 20)
    vmem_bytes = int(min(cap, max(16 << 20, need)))

    out = pl.pallas_call(
        kernel,
        out_shape=jax.ShapeDtypeStruct((B, out_len, D), x.dtype),
        grid_spec=pl.GridSpec(grid=grid, in_specs=in_specs, out_specs=o_spec),
        compiler_params=pltpu.CompilerParams(
            dimension_semantics=("parallel", "parallel", "parallel"),
            vmem_limit_bytes=vmem_bytes,
        ),
    )(*operands)

    # Kernel-native layout is lane-dense (B, O, D); map to the PyTorch layout
    # once, outside the kernel.
    if out_len == 1:
        return jnp.squeeze(out, axis=1)              # (B, D) -- mirrors .squeeze(-1)
    return jnp.transpose(out, (0, 2, 1))             # (B, D, O)


def make_mask_embedding(segment_num):
    # Deterministic, frozen weight exactly as in AvgPool.__init__:
    # rows = [zeros(segment_num); identity(segment_num)], shape (segment_num+1, segment_num)
    w = np.concatenate([np.zeros((1, segment_num)), np.identity(segment_num)], axis=0)
    return jnp.asarray(w, dtype=jnp.float32)


# TODO(synk): the masked branch of AvgPool.forward references an undefined
# attribute `self._minus` (and unpacks 3 values from x.size()[:2]), so it is
# broken in the reference PyTorch code; only the mask=None path is implemented.


def _ref_avg_pool(x, kernel_size):
    """Plain-JAX reference of x.transpose(1,2) -> AvgPool1d(k) -> squeeze(-1)."""
    B, L, D = x.shape
    o = L // kernel_size
    pooled = jnp.mean(
        x[:, : o * kernel_size, :].reshape(B, o, kernel_size, D), axis=2
    )                                            # (B, O, D)
    if o == 1:
        return pooled[:, 0, :]                   # (B, D)
    return jnp.transpose(pooled, (0, 2, 1))      # (B, D, O)


if __name__ == "__main__":
    keys = jax.random.split(jax.random.PRNGKey(0), 4)

    # Case 1: documented use -- pool over the whole sequence -> (B, D); reduce path.
    B, L, D = 2, 8, 32
    x1 = jax.random.normal(keys[0], (B, L, D), dtype=jnp.float32)
    out1 = jax.block_until_ready(avg_pool(x1, kernel_size=L))
    assert out1.shape == (B, D), out1.shape
    np.testing.assert_allclose(np.asarray(out1),
                               np.asarray(_ref_avg_pool(x1, L)),
                               rtol=1e-5, atol=1e-5)

    # Case 2: multi-window pooling, strided-accumulation path, 128-lane D.
    x2 = jax.random.normal(keys[1], (2, 16, 256), dtype=jnp.float32)
    out2 = jax.block_until_ready(avg_pool(x2, kernel_size=4))
    assert out2.shape == (2, 256, 4), out2.shape
    np.testing.assert_allclose(np.asarray(out2),
                               np.asarray(_ref_avg_pool(x2, 4)),
                               rtol=1e-5, atol=1e-5)

    # Case 3: large window -> MXU path with hoisted averaging matrix.
    x3 = jax.random.normal(keys[2], (2, 128, 128), dtype=jnp.float32)
    out3 = jax.block_until_ready(avg_pool(x3, kernel_size=64))
    assert out3.shape == (2, 128, 2), out3.shape
    np.testing.assert_allclose(np.asarray(out3),
                               np.asarray(_ref_avg_pool(x3, 64)),
                               rtol=1e-5, atol=1e-5)

    # Case 4: bf16 input -> native-dtype MXU path, batch-merged blocks (TB > 1).
    x4_f32 = jax.random.normal(keys[3], (4, 32, 256), dtype=jnp.float32)
    x4 = x4_f32.astype(jnp.bfloat16)
    out4 = jax.block_until_ready(avg_pool(x4, kernel_size=8))
    assert out4.shape == (4, 256, 4), out4.shape
    np.testing.assert_allclose(np.asarray(out4.astype(jnp.float32)),
                               np.asarray(_ref_avg_pool(x4.astype(jnp.float32), 8)),
                               rtol=2e-2, atol=2e-2)

    # parameters that __init__ would build (unused in the mask=None path)
    _mask_emb_weight = make_mask_embedding(segment_num=3)

    print("KERNEL_OK")
</pallas_src>

<mosaic_0001>
module attributes {stable_mosaic.version = 11 : i64} {
  func.func @_pool_reduce_kernel(%arg0: i32, %arg1: i32, %arg2: i32, %arg3: memref<1x8x32xf32, #tpu.memory_space<vmem>>, %arg4: memref<1x1x32xf32, #tpu.memory_space<vmem>>) attributes {dimension_semantics = [#tpu.dimension_semantics<parallel>, #tpu.dimension_semantics<parallel>, #tpu.dimension_semantics<parallel>], iteration_bounds = array<i64: 2, 1, 1>, scalar_prefetch = 0 : i64, scratch_operands = 0 : i64, tpu.core_type = #tpu.core_type<tc>, window_params = [{transform_indices = @transform_0, window_bounds = array<i64: 1, 8, 32>}, {transform_indices = @transform_1, window_bounds = array<i64: 1, 1, 32>}]} {
    %c0_i32 = arith.constant 0 : i32
    %c0_i32_0 = arith.constant 0 : i32
    %c0_i32_1 = arith.constant 0 : i32
    %0 = tpu.memref_slice %arg3[%c0_i32, %c0_i32_0, %c0_i32_1] : memref<1x8x32xf32, #tpu.memory_space<vmem>> -> memref<1x8x32xf32, #tpu.memory_space<vmem>>
    %1 = tpu.memref_squeeze %0 : memref<1x8x32xf32, #tpu.memory_space<vmem>> -> memref<8x32xf32, #tpu.memory_space<vmem>>
    %c0 = arith.constant 0 : index
    %c0_2 = arith.constant 0 : index
    %2 = vector.load %1[%c0, %c0_2] : memref<8x32xf32, #tpu.memory_space<vmem>>, vector<8x32xf32>
    %cst = arith.constant dense<0.000000e+00> : vector<32xf32>
    %3 = vector.multi_reduction <add>, %2, %cst [0] : vector<8x32xf32> to vector<32xf32>
    %4 = vector.shape_cast %3 : vector<32xf32> to vector<1x32xf32>
    %cst_3 = arith.constant 1.250000e-01 : f32
    %5 = vector.broadcast %cst_3 : f32 to vector<1x32xf32>
    %6 = arith.mulf %4, %5 : vector<1x32xf32>
    %c0_4 = arith.constant 0 : index
    %c0_5 = arith.constant 0 : index
    %c0_6 = arith.constant 0 : index
    %7 = vector.load %arg4[%c0_4, %c0_5, %c0_6] : memref<1x1x32xf32, #tpu.memory_space<vmem>>, vector<1x1x32xf32>
    %8 = vector.shape_cast %7 : vector<1x1x32xf32> to vector<1x32xf32>
    %9 = vector.shape_cast %6 : vector<1x32xf32> to vector<1x1x32xf32>
    tpu.vector_store %arg4[%c0_4, %c0_5, %c0_6], %9 {strides = array<i32>} : memref<1x1x32xf32, #tpu.memory_space<vmem>>, vector<1x1x32xf32>,
    return
  }
  func.func @transform_0(%arg0: i32, %arg1: i32, %arg2: i32) -> (i32, i32, i32) {
    %c0_i32 = arith.constant 0 : i32
    return %arg0, %arg1, %arg2 : i32, i32, i32
  }
  func.func @transform_1(%arg0: i32, %arg1: i32, %arg2: i32) -> (i32, i32, i32) {
    %c0_i32 = arith.constant 0 : i32
    return %arg0, %arg1, %arg2 : i32, i32, i32
  }
}

</mosaic_0001>

<llo_original>
// kernel: tpu_custom_call.1
$region0: #{tpu_custom_call.1}
  #allocation0 [shape = 'u32[]', space=smem, size = 0x4, offset = 0x4, fixed_abs, tag = 'smem constant byte address 0x4 - core index']
  #allocation1 [shape = 'u32[144,128]{1,0:T(1,128)}', space=vmem, size = 0x12000, scoped, tag = 'internal scratch']
  %s0 = inlined_call_operand.hbm [shape: f32[2,8,32], index: 0, kind: input, shape index: {}]
  %s1 = inlined_call_operand.hbm [shape: f32[2,1,32], index: 1, kind: output, shape index: {}]
  %s2 = sld [smem:[#allocation0]]
  $region41: #{tpu_custom_call.1} parent=0
    _
  %s4 = ssub.s32 1, %s2
  %s5 = scalar_select 0, %s4, %s2
  $region1: #{tpu_custom_call.1} parent=0
    #allocation2 [shape = 'u8[8192]{0}', space=vmem, size = 0x2000, scoped, tag = 'input window, operand 0']
    #allocation3 [shape = 's32[2]{0}', space=sflag, size = 0x8, scoped, tag = 'scoped memory for tpu_custom_call.1']
    #allocation4 [shape = 's32[2]{0}', space=sflag, size = 0x8, scoped, tag = 'scoped memory for tpu_custom_call.1']
    #allocation5 [shape = 'u8[1024]{0}', space=vmem, size = 0x400, scoped, tag = 'output window, operand 0']
    %6 = vsyncpa [#allocation3], 0
    %s7 = scalar_lea.sflag [#allocation3], 1
    %8 = vsyncpa %s7, 0
    %9 = vsyncpa [#allocation4], 0
    %s10 = scalar_lea.sflag [#allocation4], 1
    %11 = vsyncpa %s10, 0
    loop: start=0, step=1, limit=4
    $region2: #{tpu_custom_call.1} parent=1 // loop_pre_header
      _
    $region3: #{tpu_custom_call.1} parent=1 // loop_header
      %s13 = sphi 0, %s17
      %p14 = scmp.ge.s32.totalorder %s13, 4
      %s20 = sphi 0, %s39
      %s21 = sphi 0, %s35
      %s22 = sphi 0, %s31
      %s23 = sphi 0, %s20
      %s24 = sphi 0, %s21
      %s25 = sphi 0, %s22
      %s26 = sphi 0, %s23
      %s27 = sphi 0, %s24
      %s28 = sphi 0, %s25
      %s46 = sphi 0, %s48
      %s49 = sphi 0, %s46
      %s50 = sphi 0, %s49
      %s66 = sphi 0, %s50
      %s76 = sphi 0, %s78
      %s79 = sphi 0, %s76
      %s80 = sphi 0, %s79
      %s96 = sphi 0, %s80
    $region4: #{tpu_custom_call.1} parent=1 // loop_header_branch
      %16 = sbr.rel (%p14) target = $region8
    $region5: #{tpu_custom_call.1} parent=1 // loop_body
      %s18 = ssub.s32 %s13, 1
      %s19 = ssub.s32 %s13, 2
      %s29 = sadd.s32 1, %s22
      %p30 = scmp.ge.s32.totalorder %s29, 1
      %s31 = scalar_select %p30, 0, %s29
      %s32 = sadd.s32 1, %s21
      %s33 = scalar_select %p30, %s32, %s21
      %p34 = scmp.ge.s32.totalorder %s33, 1
      %s35 = scalar_select %p34, 0, %s33
      %s36 = sadd.s32 1, %s20
      %s37 = scalar_select %p34, %s36, %s20
      %p38 = scmp.ge.s32.totalorder %s37, 2
      %s39 = scalar_select %p38, 0, %s37
      %s40 = ssub.s32 %s20, %s39
      %s41 = ssub.s32 %s21, %s35
      %s42 = sor.u32 %s40, %s41
      %s43 = ssub.s32 %s22, %s31
      %s44 = sor.u32 %s42, %s43
      %p45 = scmp.eq.s32.totalorder %s44, 0
      %s47 = sadd.s32 %s46, 1
      %s48 = scalar_select %p45, %s46, %s47
      %p51 = pneg %p45
      %p52 = scmp.eq.s32.totalorder %s13, 1
      %p53 = por %p51, %p52
      %p54 = scmp.ne.s32.totalorder %s46, %s49
      %p55 = scmp.eq.s32.totalorder %s13, 0
      %p56 = por %p54, %p55
      %p57 = scmp.ne.s32.totalorder %s46, %s49
      %p58 = scmp.eq.s32.totalorder %s18, 1
      %p59 = por %p57, %p58
      %p60 = scmp.ne.s32.totalorder %s49, %s50
      %p61 = scmp.eq.s32.totalorder %s18, 0
      %p62 = por %p60, %p61
      %p63 = scmp.ne.s32.totalorder %s49, %s50
      %p64 = scmp.eq.s32.totalorder %s19, 1
      %p65 = por %p63, %p64
      %p67 = scmp.ne.s32.totalorder %s50, %s66
      %p68 = scmp.eq.s32.totalorder %s19, 0
      %p69 = por %p67, %p68
      %s70 = ssub.s32 %s20, %s39
      %s71 = ssub.s32 %s21, %s35
      %s72 = sor.u32 %s70, %s71
      %s73 = ssub.s32 %s22, %s31
      %s74 = sor.u32 %s72, %s73
      %p75 = scmp.eq.s32.totalorder %s74, 0
      %s77 = sadd.s32 %s76, 1
      %s78 = scalar_select %p75, %s76, %s77
      %p81 = pneg %p75
      %p82 = scmp.eq.s32.totalorder %s13, 1
      %p83 = por %p81, %p82
      %p84 = scmp.ne.s32.totalorder %s76, %s79
      %p85 = scmp.eq.s32.totalorder %s13, 0
      %p86 = por %p84, %p85
      %p87 = scmp.ne.s32.totalorder %s76, %s79
      %p88 = scmp.eq.s32.totalorder %s18, 1
      %p89 = por %p87, %p88
      %p90 = scmp.ne.s32.totalorder %s79, %s80
      %p91 = scmp.eq.s32.totalorder %s18, 0
      %p92 = por %p90, %p91
      %p93 = scmp.ne.s32.totalorder %s79, %s80
      %p94 = scmp.eq.s32.totalorder %s19, 1
      %p95 = por %p93, %p94
      %p97 = scmp.ne.s32.totalorder %s80, %s96
      %p98 = scmp.eq.s32.totalorder %s19, 0
      %p99 = por %p97, %p98
      %p100 = scmp.le.s32.totalorder 1, %s13
      %p101 = scmp.lt.s32.totalorder %s13, 3
      %p102 = pnand %p100, %p101
      %p103 = pneg %p102
      // Predicated region
      $region9: #{tpu_custom_call.1} parent=5 // pred_check
        _
      $region10: #{tpu_custom_call.1} parent=5 // pred_check_branch
        %105 = sbr.rel (%p102) target = $region12
      $region11: #{tpu_custom_call.1} parent=5 // pred_region
        %s106 = ssub.s32 %s13, 1
      $region12: #{tpu_custom_call.1} parent=5 // pred_fallthru
        _
      %p107 = scmp.lt.s32.totalorder %s13, 2
      // Predicated region
      $region13: #{tpu_custom_call.1} parent=5 // pred_check
        %p108 = pneg %p107
      $region14: #{tpu_custom_call.1} parent=5 // pred_check_branch
        %110 = sbr.rel (%p108) target = $region16
      $region15: #{tpu_custom_call.1} parent=5 // pred_region
        // Predicated region
        $region17: #{tpu_custom_call.1} parent=15 // pred_check
          %p111 = pneg %p56
        $region18: #{tpu_custom_call.1} parent=15 // pred_check_branch
          %113 = sbr.rel (%p111) target = $region20
        $region19: #{tpu_custom_call.1} parent=15 // pred_region
          %s114 = sand.u32 %s46, 1
          %s115 = scalar_lea.sflag [#allocation3], %s114
          %s116 = sand.u32 %s46, 1
          %s117 = smul.addr %s116, 8
          %s118 = scalar_lea.vmem [#allocation2], %s117
          %s120 = ssub.s32 128, 128
          %121 = vsyncadd %s115, %s120
          %s122 = sadd.s32 %s22, %s21
          %s123 = sadd.s32 %s122, %s20
          %s124 = smul.addr %s123, 128
          %s125 = scalar_lea.hbm %s0, %s124
          %s127 = sshll.u32 %s118, 4
          %s128 = int_to_ptr.vmem [resolvable:$true] %s127
          %130 = dma.hbm_to_vmem [thread:$0]  %s125, 128, %s128, %s115
        $region20: #{tpu_custom_call.1} parent=15 // pred_fallthru
          _
      $region16: #{tpu_custom_call.1} parent=5 // pred_fallthru
        _
      %p131 = scmp.le.s32.totalorder 1, %s13
      %p132 = scmp.lt.s32.totalorder %s13, 3
      %p133 = pnand %p131, %p132
      %p134 = pneg %p133
      // Predicated region
      $region21: #{tpu_custom_call.1} parent=5 // pred_check
        _
      $region22: #{tpu_custom_call.1} parent=5 // pred_check_branch
        %136 = sbr.rel (%p133) target = $region24
      $region23: #{tpu_custom_call.1} parent=5 // pred_region
        %s137 = ssub.s32 %s13, 1
        %s138 = sand.u32 %s49, 1
        %s139 = scalar_lea.sflag [#allocation3], %s138
        %s140 = sand.u32 %s49, 1
        %s141 = smul.addr %s140, 8
        %s142 = scalar_lea.vmem [#allocation2], %s141
        // Predicated region
        $region25: #{tpu_custom_call.1} parent=23 // pred_check
          %p143 = pneg %p62
        $region26: #{tpu_custom_call.1} parent=23 // pred_check_branch
          %145 = sbr.rel (%p143) target = $region28
        $region27: #{tpu_custom_call.1} parent=23 // pred_region
          %146 = dma.done %s139, 128
        $region28: #{tpu_custom_call.1} parent=23 // pred_fallthru
          _
        %s147 = sand.u32 %s49, 1
        %s148 = scalar_lea.sflag [#allocation3], %s147
        %s149 = sand.u32 %s49, 1
        %s150 = smul.addr %s149, 8
        %s151 = scalar_lea.vmem [#allocation2], %s150
        %p152 = pneg %p62
        %p153 = pneg %p59
        %p154 = pneg %p92
        %p155 = pneg %p89
        %s156 = sand.u32 %s79, 1
        %s157 = scalar_lea.sflag [#allocation4], %s156
        %s158 = sand.u32 %s79, 1
        %s159 = scalar_lea.vmem [#allocation5], %s158
        %v160 = vld [vmem:[%s142] sm:$0xff]
        %vm161 = vcmask 261120
        %v162 = vsel %vm161, %v160, 0.0
        %v163 = vrot.slane %v162, 4
        %v164 = vadd.f32 %v162, %v163
        %v165 = vrot.slane %v164, 2
        %v166 = vadd.f32 %v164, %v165
        %v167 = vrot.slane %v166, 1
        %v168 = vadd.f32 %v166, %v167
        %v169 = vmul.f32 %v168, 0.125
        %vm170 = vcmask 253952
        %171 = vst.msk [vmem:[%s159] sm:$0x1] %vm170, %v169
        %s172 = sand.u32 %s79, 1
        %s173 = scalar_lea.sflag [#allocation4], %s172
        %s174 = sand.u32 %s79, 1
        %s175 = scalar_lea.vmem [#allocation5], %s174
        // Predicated region
        $region29: #{tpu_custom_call.1} parent=23 // pred_check
          %p176 = pneg %p89
        $region30: #{tpu_custom_call.1} parent=23 // pred_check_branch
          %178 = sbr.rel (%p176) target = $region32
        $region31: #{tpu_custom_call.1} parent=23 // pred_region
          %s180 = ssub.s32 16, 16
          %181 = vsyncadd %s173, %s180
          %s182 = sadd.s32 %s25, %s24
          %s183 = sadd.s32 %s182, %s23
          %s184 = smul.addr %s183, 16
          %s185 = scalar_lea.hbm %s1, %s184
          %s187 = sshll.u32 %s175, 4
          %s188 = int_to_ptr.vmem [resolvable:$true] %s187
          %190 = dma.vmem_to_hbm [thread:$0]  %s188, 16, %s185, %s173
        $region32: #{tpu_custom_call.1} parent=23 // pred_fallthru
          _
      $region24: #{tpu_custom_call.1} parent=5 // pred_fallthru
        _
      %p191 = scmp.le.s32.totalorder 2, %s13
      // Predicated region
      $region33: #{tpu_custom_call.1} parent=5 // pred_check
        %p192 = pneg %p191
      $region34: #{tpu_custom_call.1} parent=5 // pred_check_branch
        %194 = sbr.rel (%p192) target = $region36
      $region35: #{tpu_custom_call.1} parent=5 // pred_region
        %s195 = ssub.s32 %s13, 2
        // Predicated region
        $region37: #{tpu_custom_call.1} parent=35 // pred_check
          %p196 = pneg %p95
        $region38: #{tpu_custom_call.1} parent=35 // pred_check_branch
          %198 = sbr.rel (%p196) target = $region40
        $region39: #{tpu_custom_call.1} parent=35 // pred_region
          %s199 = sand.u32 %s80, 1
          %s200 = scalar_lea.sflag [#allocation4], %s199
          %s201 = sand.u32 %s80, 1
          %s202 = scalar_lea.vmem [#allocation5], %s201
          %203 = dma.done %s200, 16
        $region40: #{tpu_custom_call.1} parent=35 // pred_fallthru
          _
      $region36: #{tpu_custom_call.1} parent=5 // pred_fallthru
        _
    $region6: #{tpu_custom_call.1} parent=1 // loop_footer
      %s17 = sadd.s32 1, %s13
    $region7: #{tpu_custom_call.1} parent=1 // loop_footer_branch
      %12 = sbr.rel target = $region3
    $region8: #{tpu_custom_call.1} parent=1 // loop_exit
      _
    %204 = vsyncpa [#allocation3], 1
    %s205 = scalar_lea.sflag [#allocation3], 1
    %206 = vsyncpa %s205, 1
    %207 = vsyncpa [#allocation4], 1
    %s208 = scalar_lea.sflag [#allocation4], 1
    %209 = vsyncpa %s208, 1

</llo_original>
